<compile_context>
chip_gen: v7x
topology: tpu7x:2x2x1
jax: 0.10.0
libtpu: 0.0.40
codegen_flags: <defaults>
</compile_context>

<pallas_src>
import math

import numpy as np
import jax
import jax.numpy as jnp
from jax.experimental import pallas as pl
from jax.experimental.pallas import tpu as pltpu


def _kernel(t_ref, ft_ref, w1_ref, b1_ref, w2_ref, b2_ref, out_ref):
    # Sinusoidal embedding via the phase trick: one sin covers sin|cos halves.
    freqs = ft_ref[0:1, :]                       # (1, E)
    phase = ft_ref[1:2, :]                       # (1, E)
    arg = t_ref[...] * freqs + phase             # (TB, 1) * (1, E) -> (TB, E)
    temb = jnp.sin(arg)                          # EUP transcendental

    # dense(E -> H) + LeakyReLU(0.2); bf16 MXU operands, f32 accumulation.
    h = jnp.dot(temb.astype(jnp.bfloat16), w1_ref[...],
                preferred_element_type=jnp.float32) + b1_ref[...]
    h = jnp.where(h > 0, h, 0.2 * h)

    # dense(H -> O).  O < 128 lanes -> masked partial stores; noise at these
    # sizes, so no output padding.
    out_ref[...] = jnp.dot(h.astype(jnp.bfloat16), w2_ref[...],
                           preferred_element_type=jnp.float32) + b2_ref[...]


def prepare_params(w1, b1, w2, b2, *, embedding_dim):
    """One-time parameter preparation (hoisted out of the hot path).

    w1: (E, H), w2: (H, O)  -- transpose of PyTorch nn.Linear.weight.
    Returns bf16 weights, f32 (1, N) bias rows, and the (2, E) freq/phase
    table baked from numpy constants.
    """
    assert embedding_dim % 2 == 0 and embedding_dim >= 4, (
        "embedding_dim must be even and >= 4")
    half = embedding_dim // 2
    log_coef = -math.log(10000.0) / (half - 1)
    freqs = np.exp(np.arange(half, dtype=np.float64) * log_coef)
    table = np.stack([
        np.concatenate([freqs, freqs]),                               # frequency
        np.concatenate([np.zeros(half), np.full(half, np.pi / 2)]),  # phase
    ]).astype(np.float32)                                             # (2, E)
    return dict(
        table=jnp.asarray(table),
        w1=jnp.asarray(w1, dtype=jnp.bfloat16),
        b1=jnp.asarray(b1, dtype=jnp.float32).reshape(1, -1),
        w2=jnp.asarray(w2, dtype=jnp.bfloat16),
        b2=jnp.asarray(b2, dtype=jnp.float32).reshape(1, -1),
    )


def timestep_embedding(t, params, *, block_b=256):
    """t: (B,) float timesteps -> (B, output_dim) float32."""
    table, w1, b1, w2, b2 = (params["table"], params["w1"], params["b1"],
                             params["w2"], params["b2"])
    B = t.shape[0]
    E = table.shape[1]
    H = w1.shape[1]
    O = w2.shape[1]

    # Only per-call wrapper op (no-op cast if t is already f32).
    t2 = t.astype(jnp.float32).reshape(B, 1)

    # Small B: single full block (grid of 1).  Large B: 256-row tiles,
    # pipelined over a "parallel" grid axis.
    tb = B if B <= block_b else block_b
    grid = (pl.cdiv(B, tb),)
    resident = lambda i: (0, 0)   # weights/biases/table stay VMEM-resident

    return pl.pallas_call(
        _kernel,
        out_shape=jax.ShapeDtypeStruct((B, O), jnp.float32),
        grid=grid,
        in_specs=[
            pl.BlockSpec((tb, 1), lambda i: (i, 0)),   # t        (B, 1) f32
            pl.BlockSpec((2, E), resident),            # table    (2, E) f32
            pl.BlockSpec((E, H), resident),            # w1       (E, H) bf16
            pl.BlockSpec((1, H), resident),            # b1       (1, H) f32
            pl.BlockSpec((H, O), resident),            # w2       (H, O) bf16
            pl.BlockSpec((1, O), resident),            # b2       (1, O) f32
        ],
        out_specs=pl.BlockSpec((tb, O), lambda i: (i, 0)),
        compiler_params=pltpu.CompilerParams(
            dimension_semantics=("parallel",)),
    )(t2, table, w1, b1, w2, b2)


def _reference(t, w1, b1, w2, b2, embedding_dim):
    # Pure-JAX f32 reference mirroring layers.get_timestep_embedding + MLP.
    half = embedding_dim // 2
    emb = math.log(10000.0) / (half - 1)
    freqs = jnp.exp(jnp.arange(half, dtype=jnp.float32) * -emb)
    arg = t.astype(jnp.float32)[:, None] * freqs[None, :]
    temb = jnp.concatenate([jnp.sin(arg), jnp.cos(arg)], axis=1)
    h = temb @ w1 + b1
    h = jnp.where(h > 0, h, 0.2 * h)
    return h @ w2 + b2


if __name__ == "__main__":
    embedding_dim, hidden_dim, output_dim = 32, 64, 32
    B = 8

    key = jax.random.PRNGKey(0)
    k_t, k_w1, k_b1, k_w2, k_b2 = jax.random.split(key, 5)

    # Deterministic synthetic parameters (dense = nn.Linear(in, out), stored transposed).
    t = jax.random.uniform(k_t, (B,), jnp.float32, 0.0, 1000.0)
    w1 = jax.random.normal(k_w1, (embedding_dim, hidden_dim), jnp.float32) / math.sqrt(embedding_dim)
    b1 = jax.random.normal(k_b1, (hidden_dim,), jnp.float32) * 0.01
    w2 = jax.random.normal(k_w2, (hidden_dim, output_dim), jnp.float32) / math.sqrt(hidden_dim)
    b2 = jax.random.normal(k_b2, (output_dim,), jnp.float32) * 0.01

    # One-time prep (hoisted); then the hot call.
    params = prepare_params(w1, b1, w2, b2, embedding_dim=embedding_dim)
    out = jax.block_until_ready(timestep_embedding(t, params))

    ref = _reference(t, w1, b1, w2, b2, embedding_dim)
    assert out.shape == (B, output_dim)

    # bf16 MXU operands (f32 accumulation) vs f32 reference: bf16-appropriate
    # tolerance plus a relative-L2 sanity check.
    max_abs = float(jnp.max(jnp.abs(out - ref)))
    rel_l2 = float(jnp.linalg.norm(out - ref) / jnp.linalg.norm(ref))
    assert jnp.allclose(out, ref, atol=5e-2, rtol=5e-2), (max_abs, rel_l2)
    assert rel_l2 < 3e-2, rel_l2

    print("KERNEL_OK")
</pallas_src>

<mosaic_0001>
module attributes {stable_mosaic.version = 11 : i64} {
  func.func @_kernel(%arg0: i32, %arg1: memref<8x1xf32, #tpu.memory_space<vmem>>, %arg2: memref<2x32xf32, #tpu.memory_space<vmem>>, %arg3: memref<32x64xbf16, #tpu.memory_space<vmem>>, %arg4: memref<1x64xf32, #tpu.memory_space<vmem>>, %arg5: memref<64x32xbf16, #tpu.memory_space<vmem>>, %arg6: memref<1x32xf32, #tpu.memory_space<vmem>>, %arg7: memref<8x32xf32, #tpu.memory_space<vmem>>) attributes {dimension_semantics = [#tpu.dimension_semantics<parallel>], iteration_bounds = array<i64: 1>, scalar_prefetch = 0 : i64, scratch_operands = 0 : i64, tpu.core_type = #tpu.core_type<tc>, window_params = [{transform_indices = @transform_0, window_bounds = array<i64: 8, 1>}, {pipeline_mode = #tpu.pipeline_mode<synchronous>, transform_indices = @transform_1, window_bounds = array<i64: 2, 32>}, {pipeline_mode = #tpu.pipeline_mode<synchronous>, transform_indices = @transform_2, window_bounds = array<i64: 32, 64>}, {pipeline_mode = #tpu.pipeline_mode<synchronous>, transform_indices = @transform_3, window_bounds = array<i64: 1, 64>}, {pipeline_mode = #tpu.pipeline_mode<synchronous>, transform_indices = @transform_4, window_bounds = array<i64: 64, 32>}, {pipeline_mode = #tpu.pipeline_mode<synchronous>, transform_indices = @transform_5, window_bounds = array<i64: 1, 32>}, {transform_indices = @transform_6, window_bounds = array<i64: 8, 32>}]} {
    %c0 = arith.constant 0 : index
    %c0_0 = arith.constant 0 : index
    %0 = vector.load %arg2[%c0, %c0_0] : memref<2x32xf32, #tpu.memory_space<vmem>>, vector<1x32xf32>
    %c1 = arith.constant 1 : index
    %c0_1 = arith.constant 0 : index
    %1 = vector.load %arg2[%c1, %c0_1] : memref<2x32xf32, #tpu.memory_space<vmem>>, vector<1x32xf32>
    %c0_2 = arith.constant 0 : index
    %c0_3 = arith.constant 0 : index
    %2 = vector.load %arg1[%c0_2, %c0_3] : memref<8x1xf32, #tpu.memory_space<vmem>>, vector<8x1xf32>
    %3 = vector.broadcast %2 : vector<8x1xf32> to vector<8x32xf32>
    %4 = vector.broadcast %0 : vector<1x32xf32> to vector<8x32xf32>
    %5 = arith.mulf %3, %4 : vector<8x32xf32>
    %6 = vector.broadcast %1 : vector<1x32xf32> to vector<8x32xf32>
    %7 = arith.addf %5, %6 : vector<8x32xf32>
    %8 = math.sin %7 : vector<8x32xf32>
    %9 = arith.truncf %8 : vector<8x32xf32> to vector<8x32xbf16>
    %c0_4 = arith.constant 0 : index
    %c0_5 = arith.constant 0 : index
    %10 = vector.load %arg3[%c0_4, %c0_5] : memref<32x64xbf16, #tpu.memory_space<vmem>>, vector<32x64xbf16>
    %cst = arith.constant dense<0.000000e+00> : vector<8x64xf32>
    %11 = tpu.matmul %9, %10, %cst {dimension_numbers = #tpu.dot_dimension_numbers<[1], [0], [0], [1], [0, 0, 1, 1], [], []>} : vector<8x32xbf16>, vector<32x64xbf16>, vector<8x64xf32> -> vector<8x64xf32>
    %c0_6 = arith.constant 0 : index
    %c0_7 = arith.constant 0 : index
    %12 = vector.load %arg4[%c0_6, %c0_7] : memref<1x64xf32, #tpu.memory_space<vmem>>, vector<1x64xf32>
    %13 = vector.broadcast %12 : vector<1x64xf32> to vector<8x64xf32>
    %14 = arith.addf %11, %13 : vector<8x64xf32>
    %cst_8 = arith.constant 0.000000e+00 : f32
    %15 = vector.broadcast %cst_8 : f32 to vector<8x64xf32>
    %16 = arith.cmpf ogt, %14, %15 : vector<8x64xf32>
    %cst_9 = arith.constant 2.000000e-01 : f32
    %17 = vector.broadcast %cst_9 : f32 to vector<8x64xf32>
    %18 = arith.mulf %17, %14 : vector<8x64xf32>
    %19 = arith.select %16, %14, %18 : vector<8x64xi1>, vector<8x64xf32>
    %20 = arith.truncf %19 : vector<8x64xf32> to vector<8x64xbf16>
    %c0_10 = arith.constant 0 : index
    %c0_11 = arith.constant 0 : index
    %21 = vector.load %arg5[%c0_10, %c0_11] : memref<64x32xbf16, #tpu.memory_space<vmem>>, vector<64x32xbf16>
    %cst_12 = arith.constant dense<0.000000e+00> : vector<8x32xf32>
    %22 = tpu.matmul %20, %21, %cst_12 {dimension_numbers = #tpu.dot_dimension_numbers<[1], [0], [0], [1], [0, 0, 1, 1], [], []>} : vector<8x64xbf16>, vector<64x32xbf16>, vector<8x32xf32> -> vector<8x32xf32>
    %c0_13 = arith.constant 0 : index
    %c0_14 = arith.constant 0 : index
    %23 = vector.load %arg6[%c0_13, %c0_14] : memref<1x32xf32, #tpu.memory_space<vmem>>, vector<1x32xf32>
    %24 = vector.broadcast %23 : vector<1x32xf32> to vector<8x32xf32>
    %25 = arith.addf %22, %24 : vector<8x32xf32>
    %c0_15 = arith.constant 0 : index
    %c0_16 = arith.constant 0 : index
    %26 = vector.load %arg7[%c0_15, %c0_16] : memref<8x32xf32, #tpu.memory_space<vmem>>, vector<8x32xf32>
    tpu.vector_store %arg7[%c0_15, %c0_16], %25 {strides = array<i32>} : memref<8x32xf32, #tpu.memory_space<vmem>>, vector<8x32xf32>,
    return
  }
  func.func @transform_0(%arg0: i32) -> (i32, i32) {
    %c0_i32 = arith.constant 0 : i32
    %c0_i32_0 = arith.constant 0 : i32
    return %arg0, %c0_i32 : i32, i32
  }
  func.func @transform_1(%arg0: i32) -> (i32, i32) {
    %c0_i32 = arith.constant 0 : i32
    %c0_i32_0 = arith.constant 0 : i32
    %c0_i32_1 = arith.constant 0 : i32
    return %c0_i32, %c0_i32_0 : i32, i32
  }
  func.func @transform_2(%arg0: i32) -> (i32, i32) {
    %c0_i32 = arith.constant 0 : i32
    %c0_i32_0 = arith.constant 0 : i32
    %c0_i32_1 = arith.constant 0 : i32
    return %c0_i32, %c0_i32_0 : i32, i32
  }
  func.func @transform_3(%arg0: i32) -> (i32, i32) {
    %c0_i32 = arith.constant 0 : i32
    %c0_i32_0 = arith.constant 0 : i32
    %c0_i32_1 = arith.constant 0 : i32
    return %c0_i32, %c0_i32_0 : i32, i32
  }
  func.func @transform_4(%arg0: i32) -> (i32, i32) {
    %c0_i32 = arith.constant 0 : i32
    %c0_i32_0 = arith.constant 0 : i32
    %c0_i32_1 = arith.constant 0 : i32
    return %c0_i32, %c0_i32_0 : i32, i32
  }
  func.func @transform_5(%arg0: i32) -> (i32, i32) {
    %c0_i32 = arith.constant 0 : i32
    %c0_i32_0 = arith.constant 0 : i32
    %c0_i32_1 = arith.constant 0 : i32
    return %c0_i32, %c0_i32_0 : i32, i32
  }
  func.func @transform_6(%arg0: i32) -> (i32, i32) {
    %c0_i32 = arith.constant 0 : i32
    %c0_i32_0 = arith.constant 0 : i32
    return %arg0, %c0_i32 : i32, i32
  }
}

</mosaic_0001>

<llo_original>
// kernel: tpu_custom_call.1
$region0: #{tpu_custom_call.1}
  #allocation0 [shape = 'u32[]', space=smem, size = 0x4, offset = 0x4, fixed_abs, tag = 'smem constant byte address 0x4 - core index']
  #allocation1 [shape = 'u32[144,128]{1,0:T(1,128)}', space=vmem, size = 0x12000, scoped, tag = 'internal scratch']
  %s0 = inlined_call_operand.vmem [shape: f32[8,1], index: 0, kind: input, shape index: {}]
  %s1 = inlined_call_operand.vmem [shape: f32[2,32], index: 1, kind: input, shape index: {}]
  %s2 = inlined_call_operand.vmem [shape: bf16[32,64], index: 2, kind: input, shape index: {}]
  %s3 = inlined_call_operand.vmem [shape: f32[1,64], index: 3, kind: input, shape index: {}]
  %s4 = inlined_call_operand.vmem [shape: bf16[64,32], index: 4, kind: input, shape index: {}]
  %s5 = inlined_call_operand.vmem [shape: f32[1,32], index: 5, kind: input, shape index: {}]
  %s6 = inlined_call_operand.hbm [shape: f32[8,32], index: 6, kind: output, shape index: {}]
  %s7 = sld [smem:[#allocation0]]
  $region34: #{tpu_custom_call.1} parent=0
    _
  %s9 = ssub.s32 1, %s7
  %s10 = scalar_select 0, %s9, %s7
  $region1: #{tpu_custom_call.1} parent=0
    #allocation2 [shape = 'u8[4096]{0}', space=vmem, size = 0x1000, scoped, tag = 'output window, operand 0, single buffered']
    #allocation3 [shape = 's32[1]{0}', space=sflag, size = 0x4, scoped, tag = 'scoped memory for tpu_custom_call.1']
    %11 = vsyncpa [#allocation3], 0
    // Predicated region
    $region2: #{tpu_custom_call.1} parent=1 // pred_check
      _
    $region3: #{tpu_custom_call.1} parent=1 // pred_check_branch
      %13 = sbr.rel (0) target = $region5
    $region4: #{tpu_custom_call.1} parent=1 // pred_region
      _
    $region5: #{tpu_custom_call.1} parent=1 // pred_fallthru
      _
    // Predicated region
    $region6: #{tpu_custom_call.1} parent=1 // pred_check
      _
    $region7: #{tpu_custom_call.1} parent=1 // pred_check_branch
      %15 = sbr.rel (0) target = $region9
    $region8: #{tpu_custom_call.1} parent=1 // pred_region
      _
    $region9: #{tpu_custom_call.1} parent=1 // pred_fallthru
      _
    // Predicated region
    $region10: #{tpu_custom_call.1} parent=1 // pred_check
      _
    $region11: #{tpu_custom_call.1} parent=1 // pred_check_branch
      %17 = sbr.rel (0) target = $region13
    $region12: #{tpu_custom_call.1} parent=1 // pred_region
      _
    $region13: #{tpu_custom_call.1} parent=1 // pred_fallthru
      _
    // Predicated region
    $region14: #{tpu_custom_call.1} parent=1 // pred_check
      _
    $region15: #{tpu_custom_call.1} parent=1 // pred_check_branch
      %19 = sbr.rel (0) target = $region17
    $region16: #{tpu_custom_call.1} parent=1 // pred_region
      _
    $region17: #{tpu_custom_call.1} parent=1 // pred_fallthru
      _
    // Predicated region
    $region18: #{tpu_custom_call.1} parent=1 // pred_check
      _
    $region19: #{tpu_custom_call.1} parent=1 // pred_check_branch
      %21 = sbr.rel (0) target = $region21
    $region20: #{tpu_custom_call.1} parent=1 // pred_region
      _
    $region21: #{tpu_custom_call.1} parent=1 // pred_fallthru
      _
    // Predicated region
    $region22: #{tpu_custom_call.1} parent=1 // pred_check
      _
    $region23: #{tpu_custom_call.1} parent=1 // pred_check_branch
      %23 = sbr.rel (0) target = $region25
    $region24: #{tpu_custom_call.1} parent=1 // pred_region
      _
    $region25: #{tpu_custom_call.1} parent=1 // pred_fallthru
      _
    %v25 = vld [vmem:[%s1] sm:$0x1]
    %v26 = vld [vmem:[%s1 + $0x1] sm:$0x1]
    %v27 = vld [vmem:[%s0] sm:$0xff]
    %29 = vset.pattern.permute.xlu0 0
    %30 = vperm.xlu0 %29, %v27
    %v31 = vpop.permute.xlu0 %30
    %v33 = vlaneseq
    %v34 = vshrl.u32 %v33, 7
    %v35 = vsub.s32 0, %v34
    %v36 = vrot.slane %v25, %v35
    %v37 = vmul.f32 %v31, %v36
    %v38 = vlaneseq
    %v39 = vshrl.u32 %v38, 7
    %v40 = vsub.s32 0, %v39
    %v41 = vrot.slane %v26, %v40
    %v42 = vadd.f32 %v37, %v41
    %v43 = vand.u32 2147483647, %v42
    %vm44 = vcmp.le.f32.partialorder %v43, 0.7853982
    %vm45 = vcmp.lt.s32.totalorder %v42, 0
    %v46 = vand.u32 %v42, 2139095040
    %v47 = vshrl.u32 %v46, 23
    %v48 = vsub.s32 %v47, 127
    %v49 = vand.u32 2147483647, %v42
    %v50 = vand.u32 %v49, 8388607
    %v51 = vor.u32 %v50, 8388608
    %v52 = vsub.s32 0, %v51
    %v53 = vadd.s32 %v48, 1
    %vm54 = vcmp.gt.s32.totalorder %v53, 0
    %v55 = vsel %vm54, %v53, 0
    %v56 = vshrl.u32 %v55, 5
    %v57 = vand.u32 %v55, 31
    %v58 = vsub.s32 32, %v57
    %v59 = vshrl.u32 683565275, %v58
    %v60 = vshll.u32 683565275, %v57
    %v61 = vshrl.u32 2475754826, %v58
    %v62 = vor.u32 %v60, %v61
    %v63 = vshll.u32 2475754826, %v57
    %v64 = vshrl.u32 2131351028, %v58
    %v65 = vor.u32 %v63, %v64
    %v66 = vshll.u32 2131351028, %v57
    %v67 = vshrl.u32 2102212464, %v58
    %v68 = vor.u32 %v66, %v67
    %v69 = vshll.u32 2102212464, %v57
    %v70 = vshrl.u32 920167782, %v58
    %v71 = vor.u32 %v69, %v70
    %v72 = vshll.u32 920167782, %v57
    %v73 = vshrl.u32 1326507024, %v58
    %v74 = vor.u32 %v72, %v73
    %vm75 = vcmp.lt.s32.totalorder %v56, 1
    %vm76 = vcmp.lt.s32.totalorder %v56, 2
    %vm77 = vcmp.lt.s32.totalorder %v56, 3
    %vm78 = vcmp.lt.s32.totalorder %v56, 4
    %v79 = vsel %vm75, %v59, %v62
    %v80 = vsel %vm78, %v68, 2102212464
    %v81 = vsel %vm77, %v65, %v80
    %v82 = vsel %vm76, %v79, %v81
    %v83 = vsel %vm75, %v62, %v65
    %v84 = vsel %vm78, %v71, 920167782
    %v85 = vsel %vm77, %v68, %v84
    %v86 = vsel %vm76, %v83, %v85
    %v87 = vsel %vm75, %v65, %v68
    %v88 = vsel %vm78, %v74, 1326507024
    %v89 = vsel %vm77, %v71, %v88
    %v90 = vsel %vm76, %v87, %v89
    %v91 = vshll.u32 %v51, 8
    %v92 = vmul.u32.u64.compose %v91, %v90
    %v93 = vextract.low.u32 %v92
    %v94 = vextract.high.u32 %v92
    %v95 = vmul.u32.u64.compose %v91, %v86
    %v96 = vextract.low.u32 %v95
    %v97 = vextract.high.u32 %v95
    %v98 = vmul.u32 %v91, %v82
    %v99 = vadd.s32 %v94, %v96
    %vm100 = vc.u32 %v94, %v96
    %v101 = vadd.s32 %v97, 1
    %v102 = vsel %vm100, %v101, %v97
    %v103 = vadd.s32 %v98, %v102
    %v104 = vadd.s32 %v103, 536870912
    %v105 = vshrl.u32 %v104, 30
    %v106 = vshll.u32 %v105, 30
    %v107 = vsub.s32 %v103, %v106
    %vm108 = vcmp.lt.s32.totalorder %v107, 0
    %v109 = vsub.s32 0, %v107
    %v110 = vsel %vm108, %v109, %v107
    %v111 = vclz %v110
    %v112 = vsub.s32 %v111, 2
    %vm113 = vcmp.gt.s32.totalorder 0, %v112
    %v114 = vsel %vm113, 0, %v112
    %v115 = vsub.s32 32, %v114
    %v116 = vshll.u32 %v107, %v114
    %v117 = vshrl.u32 %v99, %v115
    %v118 = vor.u32 %v116, %v117
    %v119 = vsub.s32 4294967266, %v114
    %v120 = vadd.s32 %v119, 127
    %v121 = vshll.u32 %v120, 23
    %v122 = vor.u32 4788187, %v121
    %v123 = vand.u32 2147483647, %v122
    %v125 = vcvt.s32.f32 %v118
    %v126 = vmul.f32 %v125, %v123
    %v127 = vxor.u32 %v126, 2147483648
    %v128 = vsel %vm45, %v127, %v126
    %v129 = vsub.s32 4, %v105
    %v130 = vsel %vm45, %v129, %v105
    %v131 = vsel %vm44, %v42, %v128
    %v132 = vsel %vm44, 0, %v130
    %v133 = vcosq.f32.pop %v131
    %v134 = vsinq.f32.pop %v131
    %vm135 = vweird.f32 %v42
    %v136 = vadd.s32 %v132, 3
    %v137 = vand.u32 %v136, 3
    %vm138 = vcmp.lt.s32.totalorder %v137, 2
    %vm139 = vcmp.eq.s32.totalorder %v137, 0
    %v140 = vxor.u32 %v134, 2147483648
    %v141 = vsel %vm139, %v133, %v140
    %vm142 = vcmp.eq.s32.totalorder %v137, 2
    %v143 = vxor.u32 %v133, 2147483648
    %v144 = vsel %vm142, %v143, %v134
    %v145 = vsel %vm138, %v141, %v144
    %v146 = vsel %vm135, nan, %v145
    %v147 = vpack.c.bf16 %v146, %v146
    %v148 = vld [vmem:[%s2] sm:$0xf]
    %v149 = vld [vmem:[%s2 + $0x4] sm:$0xf]
    %v150 = vld [vmem:[%s2 + $0x8] sm:$0xf]
    %v151 = vld [vmem:[%s2 + $0xc] sm:$0xf]
    %v152 = vld [vmem:[%s3] sm:$0x1]
    %v154 = vlaneseq
    %v155 = vshrl.u32 %v154, 7
    %v156 = vsub.s32 0, %v155
    %v157 = vrot.slane %v152, %v156
    %v163 = vunpack.c.l.b16 %v148
    %v164 = vunpack.c.l.b16 %v149
    %v165 = vunpack.c.l.b16 %v150
    %v166 = vunpack.c.l.b16 %v151
    %v167 = vpack.c.b16 %v164, %v163
    %v168 = vpack.c.b16 %v166, %v165
    %vm171 = vcmask 261120
    %v173 = vsel %vm171, %v147, 0
    %175 = vmatprep.subr.bf16.mxu0 0
    %176 = vmatpush1.bf16.msra.mxu0 %v167
    %177 = vmatprep.subr.bf16.mxu0 0
    %178 = vmatpush1.bf16.msra.mxu0 %v168
    %179 = vmatprep.subr.bf16.mxu0 0
    %180 = vmatpush1.bf16.msra.mxu0 0
    %181 = vmatprep.subr.bf16.mxu0 0
    %182 = vmatpush1.bf16.msra.mxu0 0
    %183 = vmatprep.subr.bf16.mxu0 0
    %184 = vmatpush1.bf16.msra.mxu0 0
    %185 = vmatprep.subr.bf16.mxu0 0
    %186 = vmatpush1.bf16.msra.mxu0 0
    %187 = vmatprep.subr.bf16.mxu0 0
    %188 = vmatpush1.bf16.msra.mxu0 0
    %189 = vmatprep.subr.bf16.mxu0 0
    %190 = vmatpush1.bf16.msra.mxu0 0
    %191 = vmatprep.subr.bf16.mxu0 0
    %192 = vmatpush1.bf16.msra.mxu0 0
    %193 = vmatprep.subr.bf16.mxu0 0
    %194 = vmatpush1.bf16.msra.mxu0 0
    %195 = vmatprep.subr.bf16.mxu0 0
    %196 = vmatpush1.bf16.msra.mxu0 0
    %197 = vmatprep.subr.bf16.mxu0 0
    %198 = vmatpush1.bf16.msra.mxu0 0
    %199 = vmatprep.subr.bf16.mxu0 0
    %200 = vmatpush1.bf16.msra.mxu0 0
    %201 = vmatprep.subr.bf16.mxu0 0
    %202 = vmatpush1.bf16.msra.mxu0 0
    %203 = vmatprep.subr.bf16.mxu0 0
    %204 = vmatpush1.bf16.msra.mxu0 0
    %205 = vmatprep.subr.bf16.mxu0 0
    %206 = vmatpush1.bf16.msra.mxu0 0
    %207 = vmatprep.mubr.bf16.mxu0 0
    %208 = vmatmul.mubr.bf16.gmra.mrb[0].mxu0 %v173
    %v209 = vpop.f32.mrb[0].mxu0
    %v210 = vadd.f32 %v157, %v209
    %v211 = vpop.f32.mrb[0].mxu0
    %v212 = vpop.f32.mrb[0].mxu0
    %v213 = vpop.f32.mrb[0].mxu0
    %214 = vdwg.mxu0
    %vm215 = vcmp.gt.f32.partialorder %v210, 0.0
    %v216 = vmul.f32 %v210, 0.2
    %v217 = vsel %vm215, %v210, %v216
    %v218 = vpack.c.bf16 %v217, %v217
    %v219 = vld [vmem:[%s4] sm:$0xf]
    %v220 = vld [vmem:[%s4 + $0x4] sm:$0xf]
    %v221 = vld [vmem:[%s4 + $0x8] sm:$0xf]
    %v222 = vld [vmem:[%s4 + $0xc] sm:$0xf]
    %v223 = vld [vmem:[%s4 + $0x10] sm:$0xf]
    %v224 = vld [vmem:[%s4 + $0x14] sm:$0xf]
    %v225 = vld [vmem:[%s4 + $0x18] sm:$0xf]
    %v226 = vld [vmem:[%s4 + $0x1c] sm:$0xf]
    %v227 = vld [vmem:[%s5] sm:$0x1]
    %v229 = vlaneseq
    %v230 = vshrl.u32 %v229, 7
    %v231 = vsub.s32 0, %v230
    %v232 = vrot.slane %v227, %v231
    %v242 = vunpack.c.l.b16 %v219
    %v243 = vunpack.c.l.b16 %v220
    %v244 = vunpack.c.l.b16 %v221
    %v245 = vunpack.c.l.b16 %v222
    %v246 = vunpack.c.l.b16 %v223
    %v247 = vunpack.c.l.b16 %v224
    %v248 = vunpack.c.l.b16 %v225
    %v249 = vunpack.c.l.b16 %v226
    %v250 = vpack.c.b16 %v243, %v242
    %v251 = vpack.c.b16 %v245, %v244
    %v252 = vpack.c.b16 %v247, %v246
    %v253 = vpack.c.b16 %v249, %v248
    %vm258 = vcmask 523264
    %v260 = vsel %vm258, %v218, 0
    %262 = vmatprep.subr.bf16.mxu0 0
    %263 = vmatpush1.bf16.msra.mxu0 %v250
    %264 = vmatprep.subr.bf16.mxu0 0
    %265 = vmatpush1.bf16.msra.mxu0 %v251
    %266 = vmatprep.subr.bf16.mxu0 0
    %267 = vmatpush1.bf16.msra.mxu0 %v252
    %268 = vmatprep.subr.bf16.mxu0 0
    %269 = vmatpush1.bf16.msra.mxu0 %v253
    %270 = vmatprep.subr.bf16.mxu0 0
    %271 = vmatpush1.bf16.msra.mxu0 0
    %272 = vmatprep.subr.bf16.mxu0 0
    %273 = vmatpush1.bf16.msra.mxu0 0
    %274 = vmatprep.subr.bf16.mxu0 0
    %275 = vmatpush1.bf16.msra.mxu0 0
    %276 = vmatprep.subr.bf16.mxu0 0
    %277 = vmatpush1.bf16.msra.mxu0 0
    %278 = vmatprep.subr.bf16.mxu0 0
    %279 = vmatpush1.bf16.msra.mxu0 0
    %280 = vmatprep.subr.bf16.mxu0 0
    %281 = vmatpush1.bf16.msra.mxu0 0
    %282 = vmatprep.subr.bf16.mxu0 0
    %283 = vmatpush1.bf16.msra.mxu0 0
    %284 = vmatprep.subr.bf16.mxu0 0
    %285 = vmatpush1.bf16.msra.mxu0 0
    %286 = vmatprep.subr.bf16.mxu0 0
    %287 = vmatpush1.bf16.msra.mxu0 0
    %288 = vmatprep.subr.bf16.mxu0 0
    %289 = vmatpush1.bf16.msra.mxu0 0
    %290 = vmatprep.subr.bf16.mxu0 0
    %291 = vmatpush1.bf16.msra.mxu0 0
    %292 = vmatprep.subr.bf16.mxu0 0
    %293 = vmatpush1.bf16.msra.mxu0 0
    %294 = vmatprep.mubr.bf16.mxu0 0
    %295 = vmatmul.mubr.bf16.gmra.mrb[0].mxu0 %v260
    %v296 = vpop.f32.mrb[0].mxu0
    %v297 = vadd.f32 %v232, %v296
    %v298 = vpop.f32.mrb[0].mxu0
    %v299 = vpop.f32.mrb[0].mxu0
    %v300 = vpop.f32.mrb[0].mxu0
    %301 = vdwg.mxu0
    %302 = vst.msk [vmem:[#allocation2] sm:$0xff] %vm171, %v297
    // Predicated region
    $region26: #{tpu_custom_call.1} parent=1 // pred_check
      _
    $region27: #{tpu_custom_call.1} parent=1 // pred_check_branch
      %304 = sbr.rel (0) target = $region29
    $region28: #{tpu_custom_call.1} parent=1 // pred_region
      %s306 = ssub.s32 128, 128
      %307 = vsyncadd [#allocation3], %s306
      %s309 = sshll.u32 [#allocation2], 4
      %s310 = int_to_ptr.vmem [resolvable:$true] %s309
      %312 = dma.vmem_to_hbm [thread:$0]  %s310, 128, %s6, [#allocation3]
    $region29: #{tpu_custom_call.1} parent=1 // pred_fallthru
      _
    // Predicated region
    $region30: #{tpu_custom_call.1} parent=1 // pred_check
      _
    $region31: #{tpu_custom_call.1} parent=1 // pred_check_branch
      %314 = sbr.rel (0) target = $region33
    $region32: #{tpu_custom_call.1} parent=1 // pred_region
      %315 = dma.done [#allocation3], 128
    $region33: #{tpu_custom_call.1} parent=1 // pred_fallthru
      _
    %316 = vsyncpa [#allocation3], 1

</llo_original>
